<compile_context>
chip_gen: v7x
topology: tpu7x:2x2x1
jax: 0.10.0
libtpu: 0.0.40
codegen_flags: <defaults>
</compile_context>

<pallas_src>
import functools

import jax
import jax.numpy as jnp
from jax import lax
from jax.experimental import pallas as pl
from jax.experimental.pallas import tpu as pltpu


def _round_up(v, m):
    return ((v + m - 1) // m) * m


def _sublane_multiple(dtype):
    # Sub-32-bit dtypes pack along sublanes: native second-minor multiple is
    # 8 (f32), 16 (bf16), 32 (int8 / fp8).
    return max(8, 32 // jnp.dtype(dtype).itemsize)


def _vmem_limit_bytes():
    # Generation-aware scoped-VMEM budget.  v5e/v6e have 128 MiB physical
    # VMEM (raise well past the 16/32 MiB scoped default); v7x only has
    # 64 MiB per TensorCore, so stay at 32 MiB to keep double-buffer headroom.
    try:
        physical = pltpu.get_tpu_info().vmem_capacity_bytes
    except Exception:  # interpret mode / older jax: be conservative (v7x-safe)
        physical = 64 * 1024 * 1024
    if physical >= 128 * 1024 * 1024:
        return 96 * 1024 * 1024
    return 32 * 1024 * 1024


def _linear_kernel(x_ref, w_ref, b_ref, o_ref, acc_ref, *, precision):
    """One (TM, TN) output tile; K is the last (reduction) grid axis.

    x_ref:   (TM, TK)  activation tile
    w_ref:   (TK, TN)  weight tile, already transposed to K-major in wrapper
    b_ref:   (1,  TN)  bias tile (f32)
    o_ref:   (TM, TN)  output tile
    acc_ref: (TM, TN)  f32 accumulator scratch (lives across K steps)
    """
    k = pl.program_id(2)

    @pl.when(k == 0)
    def _init():
        # Fold the bias into the accumulator init: one broadcast, one store,
        # executed once per output tile (not per K step).
        acc_ref[...] = jnp.broadcast_to(b_ref[...], acc_ref.shape)

    # (TM,TK) @ (TK,TN) in MXU-native layout (no per-step weight transpose),
    # accumulating in f32.
    acc_ref[...] += lax.dot_general(
        x_ref[...],
        w_ref[...],
        dimension_numbers=(((1,), (0,)), ((), ())),
        preferred_element_type=jnp.float32,
        precision=precision,
    )

    @pl.when(k == pl.num_programs(2) - 1)
    def _finalize():
        o_ref[...] = acc_ref[...].astype(o_ref.dtype)


def make_logistic_regression(
    weight,
    bias,
    *,
    tm=512,
    tn=256,
    tk=512,
    compute_dtype=None,
    precision=None,
    force_pallas=False,
):
    """Build a forward fn equivalent to torch.nn.Linear(input_dim, output_dim).

    weight: (output_dim, input_dim) float32  (PyTorch layout)
    bias:   (output_dim,)           float32
    compute_dtype: optional MXU input dtype (e.g. jnp.bfloat16); accumulation
                   stays float32.
    Returns forward(x: (batch, input_dim)) -> (batch, output_dim) in x.dtype.
    """
    weight = jnp.asarray(weight, jnp.float32)
    bias = jnp.asarray(bias, jnp.float32)
    n, k_dim = weight.shape

    in_dtype = jnp.dtype(compute_dtype) if compute_dtype is not None else jnp.dtype(jnp.float32)
    sub = _sublane_multiple(in_dtype)
    vmem_limit = _vmem_limit_bytes()

    # Lane-dim tiles; clamp to the lane-aligned problem size.
    tk_eff = min(_round_up(tk, 128), _round_up(k_dim, 128))
    tn_eff = min(_round_up(tn, 128), _round_up(n, 128))
    tm_max = _round_up(tm, sub)

    k_pad = _round_up(k_dim, tk_eff)
    n_pad = _round_up(n, tn_eff)

    # ---- One-time (build-time) parameter prep: pad, cast, transpose to (K, N).
    # Zero padding is exact: padded K rows contribute 0 to the dot product,
    # padded N columns are sliced off after the kernel.
    w_kn = jnp.pad(weight, ((0, n_pad - n), (0, k_pad - k_dim))).T.astype(in_dtype)
    b_row = jnp.pad(bias, (0, n_pad - n)).reshape(1, n_pad).astype(jnp.float32)
    # Parameter for the single-tile XLA fast path (no padding needed there).
    w_fast = weight.T.astype(in_dtype)

    if precision is None:
        precision = lax.Precision.DEFAULT
    kernel = functools.partial(_linear_kernel, precision=precision)

    def forward(x):
        m = x.shape[0]
        out_dtype = x.dtype

        tm_eff = min(tm_max, _round_up(m, sub))
        m_pad = _round_up(m, tm_eff)
        grid_i = m_pad // tm_eff
        grid_j = n_pad // tn_eff
        grid_k = k_pad // tk_eff

        # XLA fast path: a single-tile problem is pure pallas_call overhead
        # (grid-step cost + pad/slice HBM copies); plain jnp.dot is faster.
        if not force_pallas and grid_i * grid_j * grid_k == 1:
            y = jnp.dot(
                x.astype(in_dtype),
                w_fast,
                preferred_element_type=jnp.float32,
                precision=precision,
            )
            return (y + bias).astype(out_dtype)

        # Guarantee >= 2 steps on the parallel axes so v7x's two TensorCores
        # both get work (harmless extra grid step on single-TC v5e/v6e).
        if grid_i * grid_j == 1:
            half = _round_up(max(tm_eff // 2, sub), sub)
            if half < tm_eff:
                tm_eff = half
                m_pad = _round_up(m, tm_eff)
                grid_i = m_pad // tm_eff

        # Per-call activation prep: only cast/pad when actually needed.
        x_p = x if x.dtype == in_dtype else x.astype(in_dtype)
        if m_pad != m or k_pad != k_dim:
            x_p = jnp.pad(x_p, ((0, m_pad - m), (0, k_pad - k_dim)))

        out_p = pl.pallas_call(
            kernel,
            out_shape=jax.ShapeDtypeStruct((m_pad, n_pad), out_dtype),
            grid=(grid_i, grid_j, grid_k),
            in_specs=[
                pl.BlockSpec((tm_eff, tk_eff), lambda i, j, kk: (i, kk)),
                pl.BlockSpec((tk_eff, tn_eff), lambda i, j, kk: (kk, j)),
                pl.BlockSpec((1, tn_eff), lambda i, j, kk: (0, j)),
            ],
            out_specs=pl.BlockSpec((tm_eff, tn_eff), lambda i, j, kk: (i, j)),
            scratch_shapes=[pltpu.VMEM((tm_eff, tn_eff), jnp.float32)],
            compiler_params=pltpu.CompilerParams(
                # M/N independent -> megacore-shardable; K is the reduction
                # (same output block revisited) -> "arbitrary" and last.
                dimension_semantics=("parallel", "parallel", "arbitrary"),
                vmem_limit_bytes=vmem_limit,
            ),
        )(x_p, w_kn, b_row)

        if m_pad != m or n_pad != n:
            out_p = out_p[:m, :n]
        return out_p

    return jax.jit(forward)


def _ref_forward(x, weight, bias):
    return x @ weight.T + bias


if __name__ == "__main__":
    key = jax.random.PRNGKey(0)

    def make_params(kp, input_dim, output_dim):
        # Mimics torch.nn.Linear's U(-1/sqrt(in), 1/sqrt(in)) init.
        kw, kb = jax.random.split(kp)
        bound = 1.0 / jnp.sqrt(jnp.float32(input_dim))
        w = jax.random.uniform(
            kw, (output_dim, input_dim), jnp.float32, minval=-bound, maxval=bound
        )
        b = jax.random.uniform(
            kb, (output_dim,), jnp.float32, minval=-bound, maxval=bound
        )
        return w, b

    # Case 1: toy classifier-head shape.  force_pallas exercises the kernel's
    # lane/sublane padding path; the same shape without force_pallas takes the
    # XLA fast path (single-tile dispatch).
    k1, k2, key = jax.random.split(key, 3)
    x1 = jax.random.normal(k1, (8, 32), jnp.float32)
    w1, b1 = make_params(k2, 32, 16)
    ref1 = _ref_forward(x1, w1, b1)

    fwd1_pallas = make_logistic_regression(w1, b1, force_pallas=True)
    out1 = jax.block_until_ready(fwd1_pallas(x1))
    assert out1.shape == (8, 16)
    assert jnp.allclose(out1, ref1, atol=1e-5, rtol=1e-5)

    fwd1_fast = make_logistic_regression(w1, b1)  # grid==(1,1,1) -> jnp.dot path
    out1f = jax.block_until_ready(fwd1_fast(x1))
    assert jnp.allclose(out1f, ref1, atol=1e-5, rtol=1e-5)

    # Case 2: full (M, N, K) tiled grid with K accumulation and non-aligned N
    # (grid = (2, 2, 3) after padding).
    k3, k4, key = jax.random.split(key, 3)
    x2 = jax.random.normal(k3, (256, 384), jnp.float32)
    w2, b2 = make_params(k4, 384, 192)
    ref2 = _ref_forward(x2, w2, b2)

    fwd2 = make_logistic_regression(w2, b2, tm=128, tn=128, tk=128)
    out2 = jax.block_until_ready(fwd2(x2))
    assert out2.shape == (256, 192)
    assert jnp.allclose(out2, ref2, atol=1e-4, rtol=1e-4)

    # Case 3: bf16 MXU inputs (f32 accumulation) — half HBM traffic / full MXU
    # rate on v6e/v7x; sublane rounding switches to 16.
    fwd3 = make_logistic_regression(
        w2, b2, tm=128, tn=128, tk=128, compute_dtype=jnp.bfloat16
    )
    out3 = jax.block_until_ready(fwd3(x2))
    assert out3.shape == (256, 192)
    assert jnp.allclose(out3, ref2, atol=5e-2, rtol=5e-2)

    print("KERNEL_OK")
</pallas_src>

<mosaic_0001>
module attributes {stable_mosaic.version = 11 : i64} {
  func.func @_linear_kernel(%arg0: i32, %arg1: i32, %arg2: i32, %arg3: memref<8x128xf32, #tpu.memory_space<vmem>>, %arg4: memref<128x128xf32, #tpu.memory_space<vmem>>, %arg5: memref<1x128xf32, #tpu.memory_space<vmem>>, %arg6: memref<8x128xf32, #tpu.memory_space<vmem>>, %arg7: memref<8x128xf32, #tpu.memory_space<vmem>>) attributes {dimension_semantics = [#tpu.dimension_semantics<parallel>, #tpu.dimension_semantics<parallel>, #tpu.dimension_semantics<arbitrary>], iteration_bounds = array<i64: 1, 1, 1>, scalar_prefetch = 0 : i64, scratch_operands = 1 : i64, tpu.core_type = #tpu.core_type<tc>, window_params = [{transform_indices = @transform_0, window_bounds = array<i64: 8, 128>}, {transform_indices = @transform_1, window_bounds = array<i64: 128, 128>}, {transform_indices = @transform_2, window_bounds = array<i64: 1, 128>}, {transform_indices = @transform_3, window_bounds = array<i64: 8, 128>}]} {
    %c0_i32 = arith.constant 0 : i32
    %0 = arith.cmpi eq, %arg2, %c0_i32 : i32
    %1 = arith.extui %0 : i1 to i32
    %c0_i32_0 = arith.constant 0 : i32
    %2 = arith.cmpi ne, %1, %c0_i32_0 : i32
    scf.if %2 {
      %c0_10 = arith.constant 0 : index
      %c0_11 = arith.constant 0 : index
      %12 = vector.load %arg5[%c0_10, %c0_11] : memref<1x128xf32, #tpu.memory_space<vmem>>, vector<1x128xf32>
      %13 = vector.shape_cast %12 : vector<1x128xf32> to vector<1x128xf32>
      %14 = vector.broadcast %13 : vector<1x128xf32> to vector<8x128xf32>
      %c0_12 = arith.constant 0 : index
      %c0_13 = arith.constant 0 : index
      %15 = vector.load %arg7[%c0_12, %c0_13] : memref<8x128xf32, #tpu.memory_space<vmem>>, vector<8x128xf32>
      tpu.vector_store %arg7[%c0_12, %c0_13], %14 {strides = array<i32>} : memref<8x128xf32, #tpu.memory_space<vmem>>, vector<8x128xf32>,
    } else {
    }
    %c0 = arith.constant 0 : index
    %c0_1 = arith.constant 0 : index
    %3 = vector.load %arg7[%c0, %c0_1] : memref<8x128xf32, #tpu.memory_space<vmem>>, vector<8x128xf32>
    %c0_2 = arith.constant 0 : index
    %c0_3 = arith.constant 0 : index
    %4 = vector.load %arg3[%c0_2, %c0_3] : memref<8x128xf32, #tpu.memory_space<vmem>>, vector<8x128xf32>
    %c0_4 = arith.constant 0 : index
    %c0_5 = arith.constant 0 : index
    %5 = vector.load %arg4[%c0_4, %c0_5] : memref<128x128xf32, #tpu.memory_space<vmem>>, vector<128x128xf32>
    %cst = arith.constant dense<0.000000e+00> : vector<8x128xf32>
    %6 = tpu.matmul %4, %5, %cst {dimension_numbers = #tpu.dot_dimension_numbers<[1], [0], [0], [1], [0, 0, 1, 1], [], []>} : vector<8x128xf32>, vector<128x128xf32>, vector<8x128xf32> -> vector<8x128xf32>
    %7 = arith.addf %3, %6 : vector<8x128xf32>
    %c0_6 = arith.constant 0 : index
    %c0_7 = arith.constant 0 : index
    %8 = vector.load %arg7[%c0_6, %c0_7] : memref<8x128xf32, #tpu.memory_space<vmem>>, vector<8x128xf32>
    tpu.vector_store %arg7[%c0_6, %c0_7], %7 {strides = array<i32>} : memref<8x128xf32, #tpu.memory_space<vmem>>, vector<8x128xf32>,
    %c0_i32_8 = arith.constant 0 : i32
    %9 = arith.cmpi eq, %arg2, %c0_i32_8 : i32
    %10 = arith.extui %9 : i1 to i32
    %c0_i32_9 = arith.constant 0 : i32
    %11 = arith.cmpi ne, %10, %c0_i32_9 : i32
    scf.if %11 {
      %c0_10 = arith.constant 0 : index
      %c0_11 = arith.constant 0 : index
      %12 = vector.load %arg7[%c0_10, %c0_11] : memref<8x128xf32, #tpu.memory_space<vmem>>, vector<8x128xf32>
      %c0_12 = arith.constant 0 : index
      %c0_13 = arith.constant 0 : index
      %13 = vector.load %arg6[%c0_12, %c0_13] : memref<8x128xf32, #tpu.memory_space<vmem>>, vector<8x128xf32>
      tpu.vector_store %arg6[%c0_12, %c0_13], %12 {strides = array<i32>} : memref<8x128xf32, #tpu.memory_space<vmem>>, vector<8x128xf32>,
    } else {
    }
    return
  }
  func.func @transform_0(%arg0: i32, %arg1: i32, %arg2: i32) -> (i32, i32) {
    %c0_i32 = arith.constant 0 : i32
    return %arg0, %arg2 : i32, i32
  }
  func.func @transform_1(%arg0: i32, %arg1: i32, %arg2: i32) -> (i32, i32) {
    %c0_i32 = arith.constant 0 : i32
    return %arg2, %arg1 : i32, i32
  }
  func.func @transform_2(%arg0: i32, %arg1: i32, %arg2: i32) -> (i32, i32) {
    %c0_i32 = arith.constant 0 : i32
    %c0_i32_0 = arith.constant 0 : i32
    return %c0_i32, %arg1 : i32, i32
  }
  func.func @transform_3(%arg0: i32, %arg1: i32, %arg2: i32) -> (i32, i32) {
    %c0_i32 = arith.constant 0 : i32
    return %arg0, %arg1 : i32, i32
  }
}

</mosaic_0001>

<llo_original>
// kernel: forward.1
$region0: #{forward.1}
  #allocation0 [shape = 'u32[]', space=smem, size = 0x4, offset = 0x4, fixed_abs, tag = 'smem constant byte address 0x4 - core index']
  #allocation1 [shape = 'u32[144,128]{1,0:T(1,128)}', space=vmem, size = 0x12000, scoped, tag = 'internal scratch']
  #allocation2 [shape = 'f32[8,128]{1,0:T(8,128)}', space=vmem, size = 0x1000, scoped, tag = 'scratch operand']
  %s0 = inlined_call_operand.vmem [shape: f32[8,128], index: 0, kind: input, shape index: {}]
  %s1 = inlined_call_operand.hbm [shape: f32[128,128], index: 1, kind: input, shape index: {}]
  %s2 = inlined_call_operand.vmem [shape: f32[1,128], index: 2, kind: input, shape index: {}]
  %s3 = inlined_call_operand.hbm [shape: f32[8,128], index: 3, kind: output, shape index: {}]
  %s4 = sld [smem:[#allocation0]]
  $region34: #{forward.1} parent=0
    _
  %s6 = ssub.s32 1, %s4
  %s7 = scalar_select 0, %s6, %s4
  $region1: #{forward.1} parent=0
    #allocation3 [shape = 'u8[65536]{0}', space=vmem, size = 0x10000, scoped, tag = 'input window, operand 1, single buffered']
    #allocation4 [shape = 's32[1]{0}', space=sflag, size = 0x4, scoped, tag = 'scoped memory for forward.1']
    #allocation5 [shape = 's32[1]{0}', space=sflag, size = 0x4, scoped, tag = 'scoped memory for forward.1']
    #allocation6 [shape = 'u8[4096]{0}', space=vmem, size = 0x1000, scoped, tag = 'output window, operand 0, single buffered']
    %8 = vsyncpa [#allocation4], 0
    %9 = vsyncpa [#allocation5], 0
    // Predicated region
    $region2: #{forward.1} parent=1 // pred_check
      _
    $region3: #{forward.1} parent=1 // pred_check_branch
      %11 = sbr.rel (0) target = $region5
    $region4: #{forward.1} parent=1 // pred_region
      _
    $region5: #{forward.1} parent=1 // pred_fallthru
      _
    // Predicated region
    $region6: #{forward.1} parent=1 // pred_check
      _
    $region7: #{forward.1} parent=1 // pred_check_branch
      %13 = sbr.rel (0) target = $region9
    $region8: #{forward.1} parent=1 // pred_region
      %s15 = ssub.s32 2048, 2048
      %16 = vsyncadd [#allocation4], %s15
      %s17 = sshll.u32 [#allocation3], 4
      %s18 = int_to_ptr.vmem [resolvable:$true] %s17
      %23 = dma.hbm_to_vmem [thread:$0]  %s1, 2048, %s18, [#allocation4], 128, 128, 8
    $region9: #{forward.1} parent=1 // pred_fallthru
      _
    // Predicated region
    $region10: #{forward.1} parent=1 // pred_check
      _
    $region11: #{forward.1} parent=1 // pred_check_branch
      %25 = sbr.rel (0) target = $region13
    $region12: #{forward.1} parent=1 // pred_region
      _
    $region13: #{forward.1} parent=1 // pred_fallthru
      _
    // Predicated region
    $region14: #{forward.1} parent=1 // pred_check
      _
    $region15: #{forward.1} parent=1 // pred_check_branch
      %27 = sbr.rel (0) target = $region17
    $region16: #{forward.1} parent=1 // pred_region
      %28 = dma.done [#allocation4], 2048
    $region17: #{forward.1} parent=1 // pred_fallthru
      _
    %p29 = scmp.eq.s32.totalorder 0, 0
    // Predicated region
    $region18: #{forward.1} parent=1 // pred_check
      %p30 = pneg %p29
    $region19: #{forward.1} parent=1 // pred_check_branch
      %32 = sbr.rel (%p30) target = $region21
    $region20: #{forward.1} parent=1 // pred_region
      %v33 = vld [vmem:[%s2] sm:$0x1]
      %v35 = vlaneseq
      %v36 = vshrl.u32 %v35, 7
      %v37 = vsub.s32 0, %v36
      %v38 = vrot.slane %v33, %v37
      %40 = vst [vmem:[#allocation2] sm:$0xff] %v38
    $region21: #{forward.1} parent=1 // pred_fallthru
      _
    %v41 = vld [vmem:[#allocation2] sm:$0xff]
    %v42 = vld [vmem:[%s0] sm:$0xff]
    %v43 = vld [vmem:[#allocation3] sm:$0xff]
    %v44 = vld [vmem:[#allocation3 + $0x8] sm:$0xff]
    %v45 = vld [vmem:[#allocation3 + $0x10] sm:$0xff]
    %v46 = vld [vmem:[#allocation3 + $0x18] sm:$0xff]
    %v47 = vld [vmem:[#allocation3 + $0x20] sm:$0xff]
    %v48 = vld [vmem:[#allocation3 + $0x28] sm:$0xff]
    %v49 = vld [vmem:[#allocation3 + $0x30] sm:$0xff]
    %v50 = vld [vmem:[#allocation3 + $0x38] sm:$0xff]
    %v51 = vld [vmem:[#allocation3 + $0x40] sm:$0xff]
    %v52 = vld [vmem:[#allocation3 + $0x48] sm:$0xff]
    %v53 = vld [vmem:[#allocation3 + $0x50] sm:$0xff]
    %v54 = vld [vmem:[#allocation3 + $0x58] sm:$0xff]
    %v55 = vld [vmem:[#allocation3 + $0x60] sm:$0xff]
    %v56 = vld [vmem:[#allocation3 + $0x68] sm:$0xff]
    %v57 = vld [vmem:[#allocation3 + $0x70] sm:$0xff]
    %v58 = vld [vmem:[#allocation3 + $0x78] sm:$0xff]
    %59 = vmatprep.subr.mxu0 0.0
    %60 = vmatpush1.msra.mxu0 %v43
    %61 = vmatprep.subr.mxu0 0.0
    %62 = vmatpush1.msra.mxu0 %v44
    %63 = vmatprep.subr.mxu0 0.0
    %64 = vmatpush1.msra.mxu0 %v45
    %65 = vmatprep.subr.mxu0 0.0
    %66 = vmatpush1.msra.mxu0 %v46
    %67 = vmatprep.subr.mxu0 0.0
    %68 = vmatpush1.msra.mxu0 %v47
    %69 = vmatprep.subr.mxu0 0.0
    %70 = vmatpush1.msra.mxu0 %v48
    %71 = vmatprep.subr.mxu0 0.0
    %72 = vmatpush1.msra.mxu0 %v49
    %73 = vmatprep.subr.mxu0 0.0
    %74 = vmatpush1.msra.mxu0 %v50
    %75 = vmatprep.subr.mxu0 0.0
    %76 = vmatpush1.msra.mxu0 %v51
    %77 = vmatprep.subr.mxu0 0.0
    %78 = vmatpush1.msra.mxu0 %v52
    %79 = vmatprep.subr.mxu0 0.0
    %80 = vmatpush1.msra.mxu0 %v53
    %81 = vmatprep.subr.mxu0 0.0
    %82 = vmatpush1.msra.mxu0 %v54
    %83 = vmatprep.subr.mxu0 0.0
    %84 = vmatpush1.msra.mxu0 %v55
    %85 = vmatprep.subr.mxu0 0.0
    %86 = vmatpush1.msra.mxu0 %v56
    %87 = vmatprep.subr.mxu0 0.0
    %88 = vmatpush1.msra.mxu0 %v57
    %89 = vmatprep.subr.mxu0 0.0
    %90 = vmatpush1.msra.mxu0 %v58
    %91 = vmatprep.subr.mxu0 0.0
    %92 = vmatpush1.msra.mxu0 0.0
    %93 = vmatprep.subr.mxu0 0.0
    %94 = vmatpush1.msra.mxu0 0.0
    %95 = vmatprep.subr.mxu0 0.0
    %96 = vmatpush1.msra.mxu0 0.0
    %97 = vmatprep.subr.mxu0 0.0
    %98 = vmatpush1.msra.mxu0 0.0
    %99 = vmatprep.subr.mxu0 0.0
    %100 = vmatpush1.msra.mxu0 0.0
    %101 = vmatprep.subr.mxu0 0.0
    %102 = vmatpush1.msra.mxu0 0.0
    %103 = vmatprep.subr.mxu0 0.0
    %104 = vmatpush1.msra.mxu0 0.0
    %105 = vmatprep.subr.mxu0 0.0
    %106 = vmatpush1.msra.mxu0 0.0
    %107 = vmatprep.subr.mxu0 0.0
    %108 = vmatpush1.msra.mxu0 0.0
    %109 = vmatprep.subr.mxu0 0.0
    %110 = vmatpush1.msra.mxu0 0.0
    %111 = vmatprep.subr.mxu0 0.0
    %112 = vmatpush1.msra.mxu0 0.0
    %113 = vmatprep.subr.mxu0 0.0
    %114 = vmatpush1.msra.mxu0 0.0
    %115 = vmatprep.subr.mxu0 0.0
    %116 = vmatpush1.msra.mxu0 0.0
    %117 = vmatprep.subr.mxu0 0.0
    %118 = vmatpush1.msra.mxu0 0.0
    %119 = vmatprep.subr.mxu0 0.0
    %120 = vmatpush1.msra.mxu0 0.0
    %121 = vmatprep.subr.mxu0 0.0
    %122 = vmatpush1.msra.mxu0 0.0
    %123 = vmatprep.mubr.f32.mxu0 0.0
    %124 = vmatmul.mubr.f32.gmra.mrb[0].mxu0 %v42
    %v125 = vpop.f32.mrb[0].mxu0
    %v126 = vadd.f32 0.0, %v125
    %v127 = vpop.f32.mrb[0].mxu0
    %128 = vdwg.mxu0
    %v129 = vadd.f32 %v41, %v126
    %130 = vst [vmem:[#allocation2] sm:$0xff] %v129
    // Predicated region
    $region22: #{forward.1} parent=1 // pred_check
      %p131 = pneg %p29
    $region23: #{forward.1} parent=1 // pred_check_branch
      %133 = sbr.rel (%p131) target = $region25
    $region24: #{forward.1} parent=1 // pred_region
      %v134 = vld [vmem:[#allocation2] sm:$0xff]
      %135 = vst [vmem:[#allocation6] sm:$0xff] %v134
    $region25: #{forward.1} parent=1 // pred_fallthru
      _
    // Predicated region
    $region26: #{forward.1} parent=1 // pred_check
      _
    $region27: #{forward.1} parent=1 // pred_check_branch
      %137 = sbr.rel (0) target = $region29
    $region28: #{forward.1} parent=1 // pred_region
      %s139 = ssub.s32 128, 128
      %140 = vsyncadd [#allocation5], %s139
      %s142 = sshll.u32 [#allocation6], 4
      %s143 = int_to_ptr.vmem [resolvable:$true] %s142
      %145 = dma.vmem_to_hbm [thread:$0]  %s143, 128, %s3, [#allocation5]
    $region29: #{forward.1} parent=1 // pred_fallthru
      _
    // Predicated region
    $region30: #{forward.1} parent=1 // pred_check
      _
    $region31: #{forward.1} parent=1 // pred_check_branch
      %147 = sbr.rel (0) target = $region33
    $region32: #{forward.1} parent=1 // pred_region
      %148 = dma.done [#allocation5], 128
    $region33: #{forward.1} parent=1 // pred_fallthru
      _
    %149 = vsyncpa [#allocation4], 1
    %150 = vsyncpa [#allocation5], 1

</llo_original>
